<compile_context>
chip_gen: v7x
topology: tpu7x:2x2x1
jax: 0.10.0
libtpu: 0.0.40
codegen_flags: <defaults>
</compile_context>

<pallas_src>
import jax
import jax.numpy as jnp
from jax.experimental import pallas as pl
from jax.experimental.pallas import tpu as pltpu


# ------------------------------ helpers ------------------------------------ #

def _gelu_tanh(h):
    # TODO(synk): torch nn.GELU() defaults to the exact erf form; erf lowering is
    # not guaranteed in Mosaic, so the tanh approximation (max abs err ~3e-4) is used.
    c0 = 0.7978845608028654  # sqrt(2/pi)
    return 0.5 * h * (1.0 + jnp.tanh(c0 * (h + 0.044715 * h * h * h)))


def _pick_batch_block(n, bytes_per_image,
                      target_bytes=2 << 20,
                      max_resident_bytes=24 << 20):
    """Pick Nb (a divisor of n) images per grid step.

    Stops growing once the block reaches ~target_bytes (~1-2 MiB already hits
    ~85% of HBM roofline), keeps 4 * Nb * bytes_per_image (in+out blocks,
    double-buffered) under the v7x-safe VMEM budget, and keeps the grid length
    >= 2 when n >= 2 (v7x megacore sharding + input/output pipelining).
    """
    best = 1
    for nb in range(1, n + 1):
        if n % nb:
            continue
        if 4 * nb * bytes_per_image > max_resident_bytes:
            break
        if n >= 2 and n // nb < 2:
            break
        best = nb
        if nb * bytes_per_image >= target_bytes:
            break
    return best


def _vmem_limit(block_bytes):
    # in + out blocks, double-buffered, plus weights/slack; capped well below
    # v7x's 64 MiB physical VMEM, floored above v5e's 16 MiB default scope.
    return int(min(48 << 20, max(32 << 20, 4 * block_bytes + (2 << 20))))


# --------------------------- Pallas kernels --------------------------------- #

def _se_kernel_chw(x_ref, w1t_ref, b1_ref, w2_ref, b2_ref, o_ref):
    """Fused SE block, NCHW layout (HW on the lane axis).

    x_ref  : (Nb, C, HW)
    w1t_ref: (C, inner)   first 1x1 conv weight, transposed (W1^T)
    b1_ref : (1, inner)
    w2_ref : (C, inner)   second 1x1 conv weight
    b2_ref : (C, 1)
    o_ref  : (Nb, C, HW)
    """
    inv_hw = 1.0 / x_ref.shape[-1]                          # static python float

    # Global average pool with f32 accumulation (lane-axis reduce) -> (Nb, C, 1).
    # The f32 cast lives only inside the reduce; no full-tile f32 copy is kept.
    pooled = jnp.sum(x_ref[...].astype(jnp.float32), axis=-1, keepdims=True) * inv_hw

    # 1x1 conv C->inner: h[b,o] = sum_c W1[o,c] * pooled[b,c]  (sublane reduce)
    w1t = w1t_ref[...].astype(jnp.float32)
    h = jnp.sum(w1t[None, :, :] * pooled, axis=1, keepdims=True)        # (Nb, 1, inner)
    h = h + b1_ref[...][None]
    h = _gelu_tanh(h)

    # 1x1 conv inner->C: z[b,c] = sum_o W2[c,o] * h[b,o]  (lane reduce)
    w2 = w2_ref[...].astype(jnp.float32)
    z = jnp.sum(w2[None, :, :] * h, axis=-1, keepdims=True)             # (Nb, C, 1)
    z = z + b2_ref[...][None]

    # Sigmoid gate in f32 (EUP), then cast the tiny gate to the activation
    # dtype so the rescale runs at native (bf16 on v6e/v7x) VALU width.
    s = 1.0 / (1.0 + jnp.exp(-z))                                       # (Nb, C, 1)
    scale = s.astype(o_ref.dtype)

    # Rescale: re-read x_ref (VMEM-resident, vld only) instead of keeping a
    # live f32 copy; broadcast the gate over the lane axis.
    o_ref[...] = x_ref[...] * scale


def _se_kernel_hwc(x_ref, w1_ref, b1_ref, w2t_ref, b2_ref, o_ref):
    """Fused SE block, channel-last layout (C on the lane axis).

    x_ref  : (Nb, HW, C)
    w1_ref : (inner, C)   first 1x1 conv weight (as stored by torch, squeezed)
    b1_ref : (inner, 1)
    w2t_ref: (inner, C)   second 1x1 conv weight, transposed (W2^T)
    b2_ref : (1, C)
    o_ref  : (Nb, HW, C)
    """
    inv_hw = 1.0 / x_ref.shape[1]

    # Global average pool (sublane-axis reduce) -> (Nb, 1, C), f32 accumulation.
    pooled = jnp.sum(x_ref[...].astype(jnp.float32), axis=1, keepdims=True) * inv_hw

    # 1x1 conv C->inner: h[b,o] = sum_c W1[o,c] * pooled[b,c]  (lane reduce)
    w1 = w1_ref[...].astype(jnp.float32)
    h = jnp.sum(w1[None, :, :] * pooled, axis=-1, keepdims=True)        # (Nb, inner, 1)
    h = h + b1_ref[...][None]
    h = _gelu_tanh(h)

    # 1x1 conv inner->C: z[b,c] = sum_o W2[c,o] * h[b,o]  (sublane reduce)
    w2t = w2t_ref[...].astype(jnp.float32)
    z = jnp.sum(w2t[None, :, :] * h, axis=1, keepdims=True)             # (Nb, 1, C)
    z = z + b2_ref[...][None]

    s = 1.0 / (1.0 + jnp.exp(-z))                                       # (Nb, 1, C)
    scale = s.astype(o_ref.dtype)

    # Lane-dense store: C on lanes, gate broadcast along sublanes (free).
    o_ref[...] = x_ref[...] * scale


# --------------------------------- wrappers --------------------------------- #

def se_forward(x_nchw, w1, b1, w2, b2):
    """SEModule forward, NCHW input (matches the torch module).

    x_nchw: (N, C, H, W)
    w1: (inner, C), b1: (inner,), w2: (C, inner), b2: (C,)
    """
    N, C, H, W = x_nchw.shape
    inner = w1.shape[0]
    HW = H * W

    # Free reshape (contiguous trailing dims): x is read exactly once by the
    # kernel and written exactly once — no transpose / pad / extra HBM pass.
    x = x_nchw.reshape(N, C, HW)
    w1t = jnp.transpose(w1)            # (C, inner) — tiny, one-time
    b1r = b1.reshape(1, inner)
    b2c = b2.reshape(C, 1)

    dsize = x.dtype.itemsize
    nb = _pick_batch_block(N, C * HW * dsize)
    block_bytes = nb * C * HW * dsize

    out = pl.pallas_call(
        _se_kernel_chw,
        out_shape=jax.ShapeDtypeStruct((N, C, HW), x.dtype),
        grid=(N // nb,),
        in_specs=[
            pl.BlockSpec((nb, C, HW), lambda i: (i, 0, 0)),
            pl.BlockSpec((C, inner), lambda i: (0, 0)),
            pl.BlockSpec((1, inner), lambda i: (0, 0)),
            pl.BlockSpec((C, inner), lambda i: (0, 0)),
            pl.BlockSpec((C, 1), lambda i: (0, 0)),
        ],
        out_specs=pl.BlockSpec((nb, C, HW), lambda i: (i, 0, 0)),
        # If profiling on v7x shows exposed DMA between steps, add
        # pipeline_mode=pl.Buffered(3) on the x input spec above.
        compiler_params=pltpu.CompilerParams(
            dimension_semantics=("parallel",),
            vmem_limit_bytes=_vmem_limit(block_bytes)),
    )(x, w1t, b1r, w2, b2c)

    return out.reshape(N, C, H, W)


def se_forward_nhwc(x_nhwc, w1, b1, w2, b2):
    """SEModule forward, channel-last input (lane-dense path for small H*W,
    large C — e.g. 7x7/14x14 maps with C a multiple of 128).

    x_nhwc: (N, H, W, C)
    w1: (inner, C), b1: (inner,), w2: (C, inner), b2: (C,)
    """
    N, H, W, C = x_nhwc.shape
    inner = w1.shape[0]
    HW = H * W

    x = x_nhwc.reshape(N, HW, C)       # free reshape
    w2t = jnp.transpose(w2)            # (inner, C)
    b1r = b1.reshape(inner, 1)
    b2r = b2.reshape(1, C)

    dsize = x.dtype.itemsize
    nb = _pick_batch_block(N, C * HW * dsize)
    block_bytes = nb * C * HW * dsize

    out = pl.pallas_call(
        _se_kernel_hwc,
        out_shape=jax.ShapeDtypeStruct((N, HW, C), x.dtype),
        grid=(N // nb,),
        in_specs=[
            pl.BlockSpec((nb, HW, C), lambda i: (i, 0, 0)),
            pl.BlockSpec((inner, C), lambda i: (0, 0)),
            pl.BlockSpec((inner, 1), lambda i: (0, 0)),
            pl.BlockSpec((inner, C), lambda i: (0, 0)),
            pl.BlockSpec((1, C), lambda i: (0, 0)),
        ],
        out_specs=pl.BlockSpec((nb, HW, C), lambda i: (i, 0, 0)),
        compiler_params=pltpu.CompilerParams(
            dimension_semantics=("parallel",),
            vmem_limit_bytes=_vmem_limit(block_bytes)),
    )(x, w1, b1r, w2t, b2r)

    return out.reshape(N, H, W, C)


# -------------------------- pure-JAX references ------------------------------ #

def _ref_forward(x, w1, b1, w2, b2):
    """Direct translation of SEModule.forward (exact-erf GELU, like torch), NCHW."""
    pooled = jnp.mean(x, axis=(2, 3))                        # (N, C)
    h = jax.nn.gelu(pooled @ w1.T + b1, approximate=False)   # (N, inner)
    s = jax.nn.sigmoid(h @ w2.T + b2)                        # (N, C)
    return x * s[:, :, None, None]


def _ref_forward_nhwc(x, w1, b1, w2, b2):
    pooled = jnp.mean(x, axis=(1, 2))                        # (N, C)
    h = jax.nn.gelu(pooled @ w1.T + b1, approximate=False)
    s = jax.nn.sigmoid(h @ w2.T + b2)
    return x * s[:, None, None, :]


# ---------------------------------- main ------------------------------------ #

if __name__ == "__main__":
    red = 8
    root = jax.random.PRNGKey(0)
    kx, k1, kb1, k2, kb2, kx2, k12, kb12, k22, kb22 = jax.random.split(root, 10)

    # ---- NCHW path (matches the torch module's default data format) ----
    N, C, H, W = 2, 4, 16, 16
    inner = max(16, C // red)          # = 16
    x = jax.random.normal(kx, (N, C, H, W), jnp.float32)
    w1 = 0.2 * jax.random.normal(k1, (inner, C), jnp.float32)
    b1 = 0.1 * jax.random.normal(kb1, (inner,), jnp.float32)
    w2 = 0.2 * jax.random.normal(k2, (C, inner), jnp.float32)
    b2 = 0.1 * jax.random.normal(kb2, (C,), jnp.float32)

    out = jax.block_until_ready(se_forward(x, w1, b1, w2, b2))
    ref = _ref_forward(x, w1, b1, w2, b2)
    assert out.shape == (N, C, H, W)
    assert jnp.allclose(out, ref, atol=3e-3, rtol=3e-3)

    # ---- channel-last lane-dense path (small map, C multiple of 128) ----
    N2, C2, H2, W2 = 2, 128, 7, 7
    inner2 = max(16, C2 // red)        # = 16
    x2 = jax.random.normal(kx2, (N2, H2, W2, C2), jnp.float32)
    w1b = 0.2 * jax.random.normal(k12, (inner2, C2), jnp.float32)
    b1b = 0.1 * jax.random.normal(kb12, (inner2,), jnp.float32)
    w2b = 0.2 * jax.random.normal(k22, (C2, inner2), jnp.float32)
    b2b = 0.1 * jax.random.normal(kb22, (C2,), jnp.float32)

    out2 = jax.block_until_ready(se_forward_nhwc(x2, w1b, b1b, w2b, b2b))
    ref2 = _ref_forward_nhwc(x2, w1b, b1b, w2b, b2b)
    assert out2.shape == (N2, H2, W2, C2)
    assert jnp.allclose(out2, ref2, atol=3e-3, rtol=3e-3)

    print("KERNEL_OK")
</pallas_src>

<mosaic_0001>
module attributes {stable_mosaic.version = 11 : i64} {
  func.func @_se_kernel_chw(%arg0: i32, %arg1: memref<1x4x256xf32, #tpu.memory_space<vmem>>, %arg2: memref<4x16xf32, #tpu.memory_space<vmem>>, %arg3: memref<1x16xf32, #tpu.memory_space<vmem>>, %arg4: memref<4x16xf32, #tpu.memory_space<vmem>>, %arg5: memref<4x1xf32, #tpu.memory_space<vmem>>, %arg6: memref<1x4x256xf32, #tpu.memory_space<vmem>>) attributes {dimension_semantics = [#tpu.dimension_semantics<parallel>], iteration_bounds = array<i64: 2>, scalar_prefetch = 0 : i64, scratch_operands = 0 : i64, tpu.core_type = #tpu.core_type<tc>, window_params = [{transform_indices = @transform_0, window_bounds = array<i64: 1, 4, 256>}, {pipeline_mode = #tpu.pipeline_mode<synchronous>, transform_indices = @transform_1, window_bounds = array<i64: 4, 16>}, {pipeline_mode = #tpu.pipeline_mode<synchronous>, transform_indices = @transform_2, window_bounds = array<i64: 1, 16>}, {pipeline_mode = #tpu.pipeline_mode<synchronous>, transform_indices = @transform_3, window_bounds = array<i64: 4, 16>}, {pipeline_mode = #tpu.pipeline_mode<synchronous>, transform_indices = @transform_4, window_bounds = array<i64: 4, 1>}, {transform_indices = @transform_5, window_bounds = array<i64: 1, 4, 256>}]} {
    %c0 = arith.constant 0 : index
    %c0_0 = arith.constant 0 : index
    %c0_1 = arith.constant 0 : index
    %0 = vector.load %arg1[%c0, %c0_0, %c0_1] : memref<1x4x256xf32, #tpu.memory_space<vmem>>, vector<1x4x256xf32>
    %cst = arith.constant dense<0.000000e+00> : vector<1x4xf32>
    %1 = vector.multi_reduction <add>, %0, %cst [2] : vector<1x4x256xf32> to vector<1x4xf32>
    %2 = vector.shape_cast %1 : vector<1x4xf32> to vector<1x4x1xf32>
    %cst_2 = arith.constant 3.906250e-03 : f32
    %3 = vector.broadcast %cst_2 : f32 to vector<1x4x1xf32>
    %4 = arith.mulf %2, %3 : vector<1x4x1xf32>
    %c0_3 = arith.constant 0 : index
    %c0_4 = arith.constant 0 : index
    %5 = vector.load %arg2[%c0_3, %c0_4] : memref<4x16xf32, #tpu.memory_space<vmem>>, vector<4x16xf32>
    %6 = vector.shape_cast %5 : vector<4x16xf32> to vector<1x4x16xf32>
    %7 = vector.broadcast %4 : vector<1x4x1xf32> to vector<1x4x16xf32>
    %8 = arith.mulf %6, %7 : vector<1x4x16xf32>
    %cst_5 = arith.constant dense<0.000000e+00> : vector<1x16xf32>
    %9 = vector.multi_reduction <add>, %8, %cst_5 [1] : vector<1x4x16xf32> to vector<1x16xf32>
    %10 = vector.shape_cast %9 : vector<1x16xf32> to vector<1x1x16xf32>
    %c0_6 = arith.constant 0 : index
    %c0_7 = arith.constant 0 : index
    %11 = vector.load %arg3[%c0_6, %c0_7] : memref<1x16xf32, #tpu.memory_space<vmem>>, vector<1x16xf32>
    %12 = vector.shape_cast %11 : vector<1x16xf32> to vector<1x1x16xf32>
    %13 = arith.addf %10, %12 : vector<1x1x16xf32>
    %cst_8 = arith.constant 5.000000e-01 : f32
    %14 = vector.broadcast %cst_8 : f32 to vector<1x1x16xf32>
    %15 = arith.mulf %14, %13 : vector<1x1x16xf32>
    %cst_9 = arith.constant 4.471500e-02 : f32
    %16 = vector.broadcast %cst_9 : f32 to vector<1x1x16xf32>
    %17 = arith.mulf %16, %13 : vector<1x1x16xf32>
    %18 = arith.mulf %17, %13 : vector<1x1x16xf32>
    %19 = arith.mulf %18, %13 : vector<1x1x16xf32>
    %20 = arith.addf %13, %19 : vector<1x1x16xf32>
    %cst_10 = arith.constant 0.797884583 : f32
    %21 = vector.broadcast %cst_10 : f32 to vector<1x1x16xf32>
    %22 = arith.mulf %21, %20 : vector<1x1x16xf32>
    %23 = math.tanh %22 : vector<1x1x16xf32>
    %cst_11 = arith.constant 1.000000e+00 : f32
    %24 = vector.broadcast %cst_11 : f32 to vector<1x1x16xf32>
    %25 = arith.addf %24, %23 : vector<1x1x16xf32>
    %26 = arith.mulf %15, %25 : vector<1x1x16xf32>
    %c0_12 = arith.constant 0 : index
    %c0_13 = arith.constant 0 : index
    %27 = vector.load %arg4[%c0_12, %c0_13] : memref<4x16xf32, #tpu.memory_space<vmem>>, vector<4x16xf32>
    %28 = vector.shape_cast %27 : vector<4x16xf32> to vector<1x4x16xf32>
    %29 = vector.broadcast %26 : vector<1x1x16xf32> to vector<1x4x16xf32>
    %30 = arith.mulf %28, %29 : vector<1x4x16xf32>
    %cst_14 = arith.constant dense<0.000000e+00> : vector<1x4xf32>
    %31 = vector.multi_reduction <add>, %30, %cst_14 [2] : vector<1x4x16xf32> to vector<1x4xf32>
    %32 = vector.shape_cast %31 : vector<1x4xf32> to vector<1x4x1xf32>
    %c0_15 = arith.constant 0 : index
    %c0_16 = arith.constant 0 : index
    %33 = vector.load %arg5[%c0_15, %c0_16] : memref<4x1xf32, #tpu.memory_space<vmem>>, vector<4x1xf32>
    %34 = vector.shape_cast %33 : vector<4x1xf32> to vector<1x4x1xf32>
    %35 = arith.addf %32, %34 : vector<1x4x1xf32>
    %cst_17 = arith.constant 0.000000e+00 : f32
    %36 = vector.broadcast %cst_17 : f32 to vector<1x4x1xf32>
    %37 = arith.subf %36, %35 : vector<1x4x1xf32>
    %38 = math.exp %37 : vector<1x4x1xf32>
    %cst_18 = arith.constant 1.000000e+00 : f32
    %39 = vector.broadcast %cst_18 : f32 to vector<1x4x1xf32>
    %40 = arith.addf %39, %38 : vector<1x4x1xf32>
    %cst_19 = arith.constant 1.000000e+00 : f32
    %41 = vector.broadcast %cst_19 : f32 to vector<1x4x1xf32>
    %42 = arith.divf %41, %40 : vector<1x4x1xf32>
    %c0_20 = arith.constant 0 : index
    %c0_21 = arith.constant 0 : index
    %c0_22 = arith.constant 0 : index
    %43 = vector.load %arg1[%c0_20, %c0_21, %c0_22] : memref<1x4x256xf32, #tpu.memory_space<vmem>>, vector<1x4x256xf32>
    %44 = vector.broadcast %42 : vector<1x4x1xf32> to vector<1x4x256xf32>
    %45 = arith.mulf %43, %44 : vector<1x4x256xf32>
    %c0_23 = arith.constant 0 : index
    %c0_24 = arith.constant 0 : index
    %c0_25 = arith.constant 0 : index
    %46 = vector.load %arg6[%c0_23, %c0_24, %c0_25] : memref<1x4x256xf32, #tpu.memory_space<vmem>>, vector<1x4x256xf32>
    tpu.vector_store %arg6[%c0_23, %c0_24, %c0_25], %45 {strides = array<i32>} : memref<1x4x256xf32, #tpu.memory_space<vmem>>, vector<1x4x256xf32>,
    return
  }
  func.func @transform_0(%arg0: i32) -> (i32, i32, i32) {
    %c0_i32 = arith.constant 0 : i32
    %c0_i32_0 = arith.constant 0 : i32
    %c0_i32_1 = arith.constant 0 : i32
    return %arg0, %c0_i32, %c0_i32_0 : i32, i32, i32
  }
  func.func @transform_1(%arg0: i32) -> (i32, i32) {
    %c0_i32 = arith.constant 0 : i32
    %c0_i32_0 = arith.constant 0 : i32
    %c0_i32_1 = arith.constant 0 : i32
    return %c0_i32, %c0_i32_0 : i32, i32
  }
  func.func @transform_2(%arg0: i32) -> (i32, i32) {
    %c0_i32 = arith.constant 0 : i32
    %c0_i32_0 = arith.constant 0 : i32
    %c0_i32_1 = arith.constant 0 : i32
    return %c0_i32, %c0_i32_0 : i32, i32
  }
  func.func @transform_3(%arg0: i32) -> (i32, i32) {
    %c0_i32 = arith.constant 0 : i32
    %c0_i32_0 = arith.constant 0 : i32
    %c0_i32_1 = arith.constant 0 : i32
    return %c0_i32, %c0_i32_0 : i32, i32
  }
  func.func @transform_4(%arg0: i32) -> (i32, i32) {
    %c0_i32 = arith.constant 0 : i32
    %c0_i32_0 = arith.constant 0 : i32
    %c0_i32_1 = arith.constant 0 : i32
    return %c0_i32, %c0_i32_0 : i32, i32
  }
  func.func @transform_5(%arg0: i32) -> (i32, i32, i32) {
    %c0_i32 = arith.constant 0 : i32
    %c0_i32_0 = arith.constant 0 : i32
    %c0_i32_1 = arith.constant 0 : i32
    return %arg0, %c0_i32, %c0_i32_0 : i32, i32, i32
  }
}

</mosaic_0001>

<llo_original>
// kernel: tpu_custom_call.1
$region0: #{tpu_custom_call.1}
  #allocation0 [shape = 'u32[]', space=smem, size = 0x4, offset = 0x4, fixed_abs, tag = 'smem constant byte address 0x4 - core index']
  #allocation1 [shape = 'u32[144,128]{1,0:T(1,128)}', space=vmem, size = 0x12000, scoped, tag = 'internal scratch']
  %s0 = inlined_call_operand.hbm [shape: f32[2,4,256], index: 0, kind: input, shape index: {}]
  %s1 = inlined_call_operand.vmem [shape: f32[4,16], index: 1, kind: input, shape index: {}]
  %s2 = inlined_call_operand.vmem [shape: f32[1,16], index: 2, kind: input, shape index: {}]
  %s3 = inlined_call_operand.vmem [shape: f32[4,16], index: 3, kind: input, shape index: {}]
  %s4 = inlined_call_operand.vmem [shape: f32[4,1], index: 4, kind: input, shape index: {}]
  %s5 = inlined_call_operand.hbm [shape: f32[2,4,256], index: 5, kind: output, shape index: {}]
  %s6 = sld [smem:[#allocation0]]
  $region57: #{tpu_custom_call.1} parent=0
    _
  %s8 = ssub.s32 1, %s6
  %s9 = scalar_select 0, %s8, %s6
  $region1: #{tpu_custom_call.1} parent=0
    #allocation2 [shape = 'u8[8192]{0}', space=vmem, size = 0x2000, scoped, tag = 'input window, operand 0']
    #allocation3 [shape = 's32[2]{0}', space=sflag, size = 0x8, scoped, tag = 'scoped memory for tpu_custom_call.1']
    #allocation4 [shape = 's32[2]{0}', space=sflag, size = 0x8, scoped, tag = 'scoped memory for tpu_custom_call.1']
    #allocation5 [shape = 'u8[8192]{0}', space=vmem, size = 0x2000, scoped, tag = 'output window, operand 0']
    %10 = vsyncpa [#allocation3], 0
    %s11 = scalar_lea.sflag [#allocation3], 1
    %12 = vsyncpa %s11, 0
    %13 = vsyncpa [#allocation4], 0
    %s14 = scalar_lea.sflag [#allocation4], 1
    %15 = vsyncpa %s14, 0
    loop: start=0, step=1, limit=4
    $region2: #{tpu_custom_call.1} parent=1 // loop_pre_header
      _
    $region3: #{tpu_custom_call.1} parent=1 // loop_header
      %s17 = sphi 0, %s21
      %p18 = scmp.ge.s32.totalorder %s17, 4
      %s27 = sphi 0, %s29
      %s30 = sphi 0, %s27
      %s31 = sphi 0, %s30
      %s47 = sphi 0, %s31
      %s51 = sphi 0, %s51
      %s53 = sphi 0, %s51
      %s54 = sphi 0, %s53
      %s68 = sphi 0, %s54
      %s72 = sphi 0, %s72
      %s74 = sphi 0, %s72
      %s75 = sphi 0, %s74
      %s89 = sphi 0, %s75
      %s93 = sphi 0, %s93
      %s95 = sphi 0, %s93
      %s96 = sphi 0, %s95
      %s110 = sphi 0, %s96
      %s114 = sphi 0, %s114
      %s116 = sphi 0, %s114
      %s117 = sphi 0, %s116
      %s131 = sphi 0, %s117
      %s137 = sphi 0, %s139
      %s140 = sphi 0, %s137
      %s141 = sphi 0, %s140
      %s157 = sphi 0, %s141
    $region4: #{tpu_custom_call.1} parent=1 // loop_header_branch
      %20 = sbr.rel (%p18) target = $region8
    $region5: #{tpu_custom_call.1} parent=1 // loop_body
      %s22 = ssub.s32 %s17, 1
      %s23 = ssub.s32 %s17, 2
      %s24 = sadd.s32 %s17, 1
      %s25 = ssub.s32 %s17, %s24
      %p26 = scmp.eq.s32.totalorder %s25, 0
      %s28 = sadd.s32 %s27, 1
      %s29 = scalar_select %p26, %s27, %s28
      %p32 = pneg %p26
      %p33 = scmp.eq.s32.totalorder %s17, 1
      %p34 = por %p32, %p33
      %p35 = scmp.ne.s32.totalorder %s27, %s30
      %p36 = scmp.eq.s32.totalorder %s17, 0
      %p37 = por %p35, %p36
      %p38 = scmp.ne.s32.totalorder %s27, %s30
      %p39 = scmp.eq.s32.totalorder %s22, 1
      %p40 = por %p38, %p39
      %p41 = scmp.ne.s32.totalorder %s30, %s31
      %p42 = scmp.eq.s32.totalorder %s22, 0
      %p43 = por %p41, %p42
      %p44 = scmp.ne.s32.totalorder %s30, %s31
      %p45 = scmp.eq.s32.totalorder %s23, 1
      %p46 = por %p44, %p45
      %p48 = scmp.ne.s32.totalorder %s31, %s47
      %p49 = scmp.eq.s32.totalorder %s23, 0
      %p50 = por %p48, %p49
      %s52 = sadd.s32 %s51, 1
      %p55 = scmp.eq.s32.totalorder %s17, 1
      %p56 = scmp.ne.s32.totalorder %s51, %s53
      %p57 = scmp.eq.s32.totalorder %s17, 0
      %p58 = por %p56, %p57
      %p59 = scmp.ne.s32.totalorder %s51, %s53
      %p60 = scmp.eq.s32.totalorder %s22, 1
      %p61 = por %p59, %p60
      %p62 = scmp.ne.s32.totalorder %s53, %s54
      %p63 = scmp.eq.s32.totalorder %s22, 0
      %p64 = por %p62, %p63
      %p65 = scmp.ne.s32.totalorder %s53, %s54
      %p66 = scmp.eq.s32.totalorder %s23, 1
      %p67 = por %p65, %p66
      %p69 = scmp.ne.s32.totalorder %s54, %s68
      %p70 = scmp.eq.s32.totalorder %s23, 0
      %p71 = por %p69, %p70
      %s73 = sadd.s32 %s72, 1
      %p76 = scmp.eq.s32.totalorder %s17, 1
      %p77 = scmp.ne.s32.totalorder %s72, %s74
      %p78 = scmp.eq.s32.totalorder %s17, 0
      %p79 = por %p77, %p78
      %p80 = scmp.ne.s32.totalorder %s72, %s74
      %p81 = scmp.eq.s32.totalorder %s22, 1
      %p82 = por %p80, %p81
      %p83 = scmp.ne.s32.totalorder %s74, %s75
      %p84 = scmp.eq.s32.totalorder %s22, 0
      %p85 = por %p83, %p84
      %p86 = scmp.ne.s32.totalorder %s74, %s75
      %p87 = scmp.eq.s32.totalorder %s23, 1
      %p88 = por %p86, %p87
      %p90 = scmp.ne.s32.totalorder %s75, %s89
      %p91 = scmp.eq.s32.totalorder %s23, 0
      %p92 = por %p90, %p91
      %s94 = sadd.s32 %s93, 1
      %p97 = scmp.eq.s32.totalorder %s17, 1
      %p98 = scmp.ne.s32.totalorder %s93, %s95
      %p99 = scmp.eq.s32.totalorder %s17, 0
      %p100 = por %p98, %p99
      %p101 = scmp.ne.s32.totalorder %s93, %s95
      %p102 = scmp.eq.s32.totalorder %s22, 1
      %p103 = por %p101, %p102
      %p104 = scmp.ne.s32.totalorder %s95, %s96
      %p105 = scmp.eq.s32.totalorder %s22, 0
      %p106 = por %p104, %p105
      %p107 = scmp.ne.s32.totalorder %s95, %s96
      %p108 = scmp.eq.s32.totalorder %s23, 1
      %p109 = por %p107, %p108
      %p111 = scmp.ne.s32.totalorder %s96, %s110
      %p112 = scmp.eq.s32.totalorder %s23, 0
      %p113 = por %p111, %p112
      %s115 = sadd.s32 %s114, 1
      %p118 = scmp.eq.s32.totalorder %s17, 1
      %p119 = scmp.ne.s32.totalorder %s114, %s116
      %p120 = scmp.eq.s32.totalorder %s17, 0
      %p121 = por %p119, %p120
      %p122 = scmp.ne.s32.totalorder %s114, %s116
      %p123 = scmp.eq.s32.totalorder %s22, 1
      %p124 = por %p122, %p123
      %p125 = scmp.ne.s32.totalorder %s116, %s117
      %p126 = scmp.eq.s32.totalorder %s22, 0
      %p127 = por %p125, %p126
      %p128 = scmp.ne.s32.totalorder %s116, %s117
      %p129 = scmp.eq.s32.totalorder %s23, 1
      %p130 = por %p128, %p129
      %p132 = scmp.ne.s32.totalorder %s117, %s131
      %p133 = scmp.eq.s32.totalorder %s23, 0
      %p134 = por %p132, %p133
      %s135 = ssub.s32 %s17, %s24
      %p136 = scmp.eq.s32.totalorder %s135, 0
      %s138 = sadd.s32 %s137, 1
      %s139 = scalar_select %p136, %s137, %s138
      %p142 = pneg %p136
      %p143 = scmp.eq.s32.totalorder %s17, 1
      %p144 = por %p142, %p143
      %p145 = scmp.ne.s32.totalorder %s137, %s140
      %p146 = scmp.eq.s32.totalorder %s17, 0
      %p147 = por %p145, %p146
      %p148 = scmp.ne.s32.totalorder %s137, %s140
      %p149 = scmp.eq.s32.totalorder %s22, 1
      %p150 = por %p148, %p149
      %p151 = scmp.ne.s32.totalorder %s140, %s141
      %p152 = scmp.eq.s32.totalorder %s22, 0
      %p153 = por %p151, %p152
      %p154 = scmp.ne.s32.totalorder %s140, %s141
      %p155 = scmp.eq.s32.totalorder %s23, 1
      %p156 = por %p154, %p155
      %p158 = scmp.ne.s32.totalorder %s141, %s157
      %p159 = scmp.eq.s32.totalorder %s23, 0
      %p160 = por %p158, %p159
      %p161 = scmp.le.s32.totalorder 1, %s17
      %p162 = scmp.lt.s32.totalorder %s17, 3
      %p163 = pnand %p161, %p162
      %p164 = pneg %p163
      // Predicated region
      $region9: #{tpu_custom_call.1} parent=5 // pred_check
        _
      $region10: #{tpu_custom_call.1} parent=5 // pred_check_branch
        %166 = sbr.rel (%p163) target = $region12
      $region11: #{tpu_custom_call.1} parent=5 // pred_region
        %s167 = ssub.s32 %s17, 1
        // Predicated region
        $region13: #{tpu_custom_call.1} parent=11 // pred_check
          %p168 = pneg %p64
        $region14: #{tpu_custom_call.1} parent=11 // pred_check_branch
          %170 = sbr.rel (%p168) target = $region16
        $region15: #{tpu_custom_call.1} parent=11 // pred_region
          _
        $region16: #{tpu_custom_call.1} parent=11 // pred_fallthru
          _
        // Predicated region
        $region17: #{tpu_custom_call.1} parent=11 // pred_check
          %p171 = pneg %p85
        $region18: #{tpu_custom_call.1} parent=11 // pred_check_branch
          %173 = sbr.rel (%p171) target = $region20
        $region19: #{tpu_custom_call.1} parent=11 // pred_region
          _
        $region20: #{tpu_custom_call.1} parent=11 // pred_fallthru
          _
        // Predicated region
        $region21: #{tpu_custom_call.1} parent=11 // pred_check
          %p174 = pneg %p106
        $region22: #{tpu_custom_call.1} parent=11 // pred_check_branch
          %176 = sbr.rel (%p174) target = $region24
        $region23: #{tpu_custom_call.1} parent=11 // pred_region
          _
        $region24: #{tpu_custom_call.1} parent=11 // pred_fallthru
          _
        // Predicated region
        $region25: #{tpu_custom_call.1} parent=11 // pred_check
          %p177 = pneg %p127
        $region26: #{tpu_custom_call.1} parent=11 // pred_check_branch
          %179 = sbr.rel (%p177) target = $region28
        $region27: #{tpu_custom_call.1} parent=11 // pred_region
          _
        $region28: #{tpu_custom_call.1} parent=11 // pred_fallthru
          _
      $region12: #{tpu_custom_call.1} parent=5 // pred_fallthru
        _
      %p180 = scmp.lt.s32.totalorder %s17, 2
      // Predicated region
      $region29: #{tpu_custom_call.1} parent=5 // pred_check
        %p181 = pneg %p180
      $region30: #{tpu_custom_call.1} parent=5 // pred_check_branch
        %183 = sbr.rel (%p181) target = $region32
      $region31: #{tpu_custom_call.1} parent=5 // pred_region
        // Predicated region
        $region33: #{tpu_custom_call.1} parent=31 // pred_check
          %p184 = pneg %p37
        $region34: #{tpu_custom_call.1} parent=31 // pred_check_branch
          %186 = sbr.rel (%p184) target = $region36
        $region35: #{tpu_custom_call.1} parent=31 // pred_region
          %s187 = sand.u32 %s27, 1
          %s188 = scalar_lea.sflag [#allocation3], %s187
          %s189 = sand.u32 %s27, 1
          %s190 = smul.addr %s189, 8
          %s191 = scalar_lea.vmem [#allocation2], %s190
          %s193 = ssub.s32 128, 128
          %194 = vsyncadd %s188, %s193
          %s195 = smul.addr %s17, 2
          %s196 = smul.addr %s195, 64
          %s197 = scalar_lea.hbm %s0, %s196
          %s199 = sshll.u32 %s191, 4
          %s200 = int_to_ptr.vmem [resolvable:$true] %s199
          %202 = dma.hbm_to_vmem [thread:$0]  %s197, 128, %s200, %s188
        $region36: #{tpu_custom_call.1} parent=31 // pred_fallthru
          _
      $region32: #{tpu_custom_call.1} parent=5 // pred_fallthru
        _
      %p203 = scmp.le.s32.totalorder 1, %s17
      %p204 = scmp.lt.s32.totalorder %s17, 3
      %p205 = pnand %p203, %p204
      %p206 = pneg %p205
      // Predicated region
      $region37: #{tpu_custom_call.1} parent=5 // pred_check
        _
      $region38: #{tpu_custom_call.1} parent=5 // pred_check_branch
        %208 = sbr.rel (%p205) target = $region40
      $region39: #{tpu_custom_call.1} parent=5 // pred_region
        %s209 = ssub.s32 %s17, 1
        %s210 = sand.u32 %s30, 1
        %s211 = scalar_lea.sflag [#allocation3], %s210
        %s212 = sand.u32 %s30, 1
        %s213 = smul.addr %s212, 8
        %s214 = scalar_lea.vmem [#allocation2], %s213
        // Predicated region
        $region41: #{tpu_custom_call.1} parent=39 // pred_check
          %p215 = pneg %p43
        $region42: #{tpu_custom_call.1} parent=39 // pred_check_branch
          %217 = sbr.rel (%p215) target = $region44
        $region43: #{tpu_custom_call.1} parent=39 // pred_region
          %218 = dma.done %s211, 128
        $region44: #{tpu_custom_call.1} parent=39 // pred_fallthru
          _
        %s219 = sand.u32 %s30, 1
        %s220 = scalar_lea.sflag [#allocation3], %s219
        %s221 = sand.u32 %s30, 1
        %s222 = smul.addr %s221, 8
        %s223 = scalar_lea.vmem [#allocation2], %s222
        %p224 = pneg %p43
        %p225 = pneg %p40
        %p226 = pneg %p64
        %p227 = pneg %p61
        %p228 = pneg %p85
        %p229 = pneg %p82
        %p230 = pneg %p106
        %p231 = pneg %p103
        %p232 = pneg %p127
        %p233 = pneg %p124
        %p234 = pneg %p153
        %p235 = pneg %p150
        %s236 = sand.u32 %s140, 1
        %s237 = scalar_lea.sflag [#allocation4], %s236
        %s238 = sand.u32 %s140, 1
        %s239 = smul.addr %s238, 8
        %s240 = scalar_lea.vmem [#allocation5], %s239
        %v241 = vld [vmem:[%s214] sm:$0xff]
        %v243 = vcombine.high %v241, %v241
        %vm245 = vcmask 1043456
        %v246 = vsel %vm245, %v241, 0.0
        %v247 = vsel %vm245, %v243, 0.0
        %v248 = vadd.f32 %v246, %v247
        %249 = vadd.xlane.f32.xlu0 %v248
        %v250 = vpop.xlane.xlu0 %249
        %v251 = vmul.f32 %v250, 0.00390625
        %v252 = vld [vmem:[%s1] sm:$0xf]
        %v253 = vmul.f32 %v252, %v251
        %vm254 = vcmask 125952
        %v255 = vsel %vm254, %v253, 0.0
        %v256 = vrot.slane %v255, 4
        %v257 = vadd.f32 %v255, %v256
        %v258 = vrot.slane %v257, 2
        %v259 = vadd.f32 %v257, %v258
        %v260 = vrot.slane %v259, 1
        %v261 = vadd.f32 %v259, %v260
        %v262 = vld [vmem:[%s2] sm:$0x1]
        %v263 = vadd.f32 %v261, %v262
        %v264 = vmul.f32 %v263, 0.5
        %v265 = vmul.f32 %v263, 0.044715
        %v266 = vmul.f32 %v265, %v263
        %v267 = vmul.f32 %v266, %v263
        %v268 = vadd.f32 %v263, %v267
        %v269 = vmul.f32 %v268, 0.7978846
        %v270 = vtanh.pop %v269
        %v271 = vadd.f32 %v270, 1.0
        %v272 = vmul.f32 %v264, %v271
        %v273 = vld [vmem:[%s3] sm:$0xf]
        %v274 = vlaneseq
        %v275 = vshrl.u32 %v274, 7
        %v276 = vsub.s32 0, %v275
        %v277 = vrot.slane %v272, %v276
        %v278 = vmul.f32 %v273, %v277
        %v279 = vsel %vm254, %v278, 0.0
        %280 = vadd.xlane.f32.xlu0 %v279
        %v281 = vpop.xlane.xlu0 %280
        %v282 = vld [vmem:[%s4] sm:$0xf]
        %v283 = vadd.f32 %v281, %v282
        %v284 = vsub.f32 0.0, %v283
        %v285 = vmul.f32 %v284, 1.442695
        %v286 = vpow.pop %v285
        %v287 = vadd.f32 %v286, 1.0
        %v288 = vrcp.pop %v287
        %v289 = vmul.f32 1.0, %v288
        %291 = vset.pattern.permute.xlu0 0
        %292 = vperm.xlu0 %291, %v289
        %v293 = vpop.permute.xlu0 %292
        %v295 = vunpack.c.l.s4 839922192
        %v296 = vunpack.c.0.s8 %v295
        %v297 = vlaneseq
        %v298 = vshrl.u32 %v297, 7
        %v299 = vsub.s32 %v296, %v298
        %v300 = vrot.slane %v293, %v299
        %v302 = vmul.f32 %v241, %v300
        %303 = vst [vmem:[%s240] sm:$0xff] %v302
        %s304 = sand.u32 %s140, 1
        %s305 = scalar_lea.sflag [#allocation4], %s304
        %s306 = sand.u32 %s140, 1
        %s307 = smul.addr %s306, 8
        %s308 = scalar_lea.vmem [#allocation5], %s307
        // Predicated region
        $region45: #{tpu_custom_call.1} parent=39 // pred_check
          %p309 = pneg %p150
        $region46: #{tpu_custom_call.1} parent=39 // pred_check_branch
          %311 = sbr.rel (%p309) target = $region48
        $region47: #{tpu_custom_call.1} parent=39 // pred_region
          %s313 = ssub.s32 128, 128
          %314 = vsyncadd %s305, %s313
          %s315 = smul.addr %s22, 2
          %s316 = smul.addr %s315, 64
          %s317 = scalar_lea.hbm %s5, %s316
          %s319 = sshll.u32 %s308, 4
          %s320 = int_to_ptr.vmem [resolvable:$true] %s319
          %322 = dma.vmem_to_hbm [thread:$0]  %s320, 128, %s317, %s305
        $region48: #{tpu_custom_call.1} parent=39 // pred_fallthru
          _
      $region40: #{tpu_custom_call.1} parent=5 // pred_fallthru
        _
      %p323 = scmp.le.s32.totalorder 2, %s17
      // Predicated region
      $region49: #{tpu_custom_call.1} parent=5 // pred_check
        %p324 = pneg %p323
      $region50: #{tpu_custom_call.1} parent=5 // pred_check_branch
        %326 = sbr.rel (%p324) target = $region52
      $region51: #{tpu_custom_call.1} parent=5 // pred_region
        %s327 = ssub.s32 %s17, 2
        // Predicated region
        $region53: #{tpu_custom_call.1} parent=51 // pred_check
          %p328 = pneg %p156
        $region54: #{tpu_custom_call.1} parent=51 // pred_check_branch
          %330 = sbr.rel (%p328) target = $region56
        $region55: #{tpu_custom_call.1} parent=51 // pred_region
          %s331 = sand.u32 %s141, 1
          %s332 = scalar_lea.sflag [#allocation4], %s331
          %s333 = sand.u32 %s141, 1
          %s334 = smul.addr %s333, 8
          %s335 = scalar_lea.vmem [#allocation5], %s334
          %336 = dma.done %s332, 128
        $region56: #{tpu_custom_call.1} parent=51 // pred_fallthru
          _
      $region52: #{tpu_custom_call.1} parent=5 // pred_fallthru
        _
    $region6: #{tpu_custom_call.1} parent=1 // loop_footer
      %s21 = sadd.s32 1, %s17
    $region7: #{tpu_custom_call.1} parent=1 // loop_footer_branch
      %16 = sbr.rel target = $region3
    $region8: #{tpu_custom_call.1} parent=1 // loop_exit
      _
    %337 = vsyncpa [#allocation3], 1
    %s338 = scalar_lea.sflag [#allocation3], 1
    %339 = vsyncpa %s338, 1
    %340 = vsyncpa [#allocation4], 1
    %s341 = scalar_lea.sflag [#allocation4], 1
    %342 = vsyncpa %s341, 1

</llo_original>
